<compile_context>
chip_gen: v5e
topology: v5e:2x2
jax: 0.10.0
libtpu: 0.0.40
codegen_flags: <defaults>
</compile_context>

<pallas_src>
import jax
import jax.numpy as jnp
from jax.experimental import pallas as pl
from jax.experimental.pallas import tpu as pltpu


def sentiment_kernel(xt_ref, w1_ref, b1_ref, w2_ref, b2_ref, w3_ref, b3_ref, o_ref):
    xt = xt_ref[...]                                                       # (D, TM) bf16
    # linear1 + ReLU : (H1, D) @ (D, TM) -> (H1, TM), f32 accumulation
    h1 = jnp.dot(w1_ref[...], xt, preferred_element_type=jnp.float32) + b1_ref[...]
    h1 = jnp.maximum(h1, 0.0)
    # TODO(synk): nn.Dropout(0.3) is identity in eval mode; training-mode stochastic
    # masking (pltpu.prng_seed + pltpu.prng_random_bits with 1/(1-p) rescale) not done.
    # linear2 : (H2, H1) @ (H1, TM) -> (H2, TM), f32 accumulation
    h2 = jnp.dot(w2_ref[...], h1.astype(jnp.bfloat16),
                 preferred_element_type=jnp.float32) + b2_ref[...]
    # output layer (128 -> 1) as a sublane reduction -> lane-dense (1, TM) row
    logits = jnp.sum(h2 * w3_ref[...], axis=0, keepdims=True) + b3_ref[...]
    o_ref[...] = jax.nn.sigmoid(logits)


def sentiment_net_forward(x, params, *, tm=256):
    """x: (B, n_embed*block_size) float32.  params in PyTorch layout:
    (w1 (256,D), b1 (256,), w2 (128,256), b2 (128,), w3 (1,128), b3 (1,)).
    Returns (B, 1) float32 probabilities."""
    w1, b1, w2, b2, w3, b3 = params
    B, D = x.shape
    H1 = w1.shape[0]
    H2 = w2.shape[0]

    # Tile the batch along the lane axis; don't over-pad tiny batches.
    tm = min(tm, pl.cdiv(B, 128) * 128)
    b_pad = pl.cdiv(B, tm) * tm
    num_tiles = b_pad // tm

    # Layout / dtype prep outside the kernel (done once per call):
    xt = jnp.zeros((D, b_pad), jnp.bfloat16).at[:, :B].set(x.T.astype(jnp.bfloat16))
    w1b = w1.astype(jnp.bfloat16)                      # (H1, D)
    w2b = w2.astype(jnp.bfloat16)                      # (H2, H1)
    b1c = b1.reshape(H1, 1).astype(jnp.float32)
    b2c = b2.reshape(H2, 1).astype(jnp.float32)
    w3c = w3.reshape(H2, 1).astype(jnp.float32)        # column for the lane reduction
    b3c = b3.reshape(1, 1).astype(jnp.float32)

    flops = 2 * b_pad * (D * H1 + H1 * H2 + H2)
    bytes_accessed = (xt.size * 2 + w1b.size * 2 + w2b.size * 2
                      + (H1 + H2 + H2 + 1) * 4 + b_pad * 4)

    out = pl.pallas_call(
        sentiment_kernel,
        out_shape=jax.ShapeDtypeStruct((1, b_pad), jnp.float32),
        grid_spec=pltpu.PrefetchScalarGridSpec(
            num_scalar_prefetch=0,
            grid=(num_tiles,),
            in_specs=[
                pl.BlockSpec((D, tm), lambda i: (0, i)),      # x^T tile (streamed)
                pl.BlockSpec((H1, D), lambda i: (0, 0)),      # w1 (resident)
                pl.BlockSpec((H1, 1), lambda i: (0, 0)),      # b1
                pl.BlockSpec((H2, H1), lambda i: (0, 0)),     # w2 (resident)
                pl.BlockSpec((H2, 1), lambda i: (0, 0)),      # b2
                pl.BlockSpec((H2, 1), lambda i: (0, 0)),      # w3 column
                pl.BlockSpec((1, 1), lambda i: (0, 0)),       # b3
            ],
            out_specs=pl.BlockSpec((1, tm), lambda i: (0, i)),
        ),
        compiler_params=pltpu.CompilerParams(dimension_semantics=("parallel",)),
        cost_estimate=pl.CostEstimate(flops=flops, transcendentals=b_pad,
                                      bytes_accessed=bytes_accessed),
    )(xt, w1b, b1c, w2b, b2c, w3c, b3c)

    return out[0, :B].reshape(B, 1)


def init_params(key, n_embed, block_size):
    """Deterministic init mirroring nn.Linear: weights (out, in), biases (out,)."""
    d_in = n_embed * block_size
    dims = [(d_in, 256), (256, 128), (128, 1)]
    params = []
    for i, (fi, fo) in enumerate(dims):
        kw, kb = jax.random.split(jax.random.fold_in(key, i))
        bound = 1.0 / jnp.sqrt(fi)
        w = jax.random.uniform(kw, (fo, fi), jnp.float32, -bound, bound)
        b = jax.random.uniform(kb, (fo,), jnp.float32, -bound, bound)
        params += [w, b]
    return tuple(params)


if __name__ == "__main__":
    n_embed, block_size, batch = 8, 8, 8          # input features = 64
    key = jax.random.PRNGKey(0)
    kx, kp = jax.random.split(key)
    x = jax.random.normal(kx, (batch, n_embed * block_size), jnp.float32)
    params = init_params(kp, n_embed, block_size)

    y = sentiment_net_forward(x, params)
    jax.block_until_ready(y)

    # plain-JAX f32 reference (kernel uses bf16 matmul operands -> loose tolerance)
    w1, b1, w2, b2, w3, b3 = params
    h = jnp.maximum(x @ w1.T + b1, 0.0)
    h = h @ w2.T + b2
    y_ref = jax.nn.sigmoid(h @ w3.T + b3)
    assert y.shape == (batch, 1)
    assert jnp.allclose(y, y_ref, atol=1e-2, rtol=0.0), (y, y_ref)
    print("KERNEL_OK")
</pallas_src>

<mosaic_0001>
module attributes {stable_mosaic.version = 11 : i64} {
  func.func @sentiment_kernel(%arg0: i32, %arg1: memref<64x128xbf16, #tpu.memory_space<vmem>>, %arg2: memref<256x64xbf16, #tpu.memory_space<vmem>>, %arg3: memref<256x1xf32, #tpu.memory_space<vmem>>, %arg4: memref<128x256xbf16, #tpu.memory_space<vmem>>, %arg5: memref<128x1xf32, #tpu.memory_space<vmem>>, %arg6: memref<128x1xf32, #tpu.memory_space<vmem>>, %arg7: memref<1x1xf32, #tpu.memory_space<vmem>>, %arg8: memref<1x128xf32, #tpu.memory_space<vmem>>) attributes {dimension_semantics = [#tpu.dimension_semantics<parallel>], iteration_bounds = array<i64: 1>, scalar_prefetch = 0 : i64, scratch_operands = 0 : i64, tpu.core_type = #tpu.core_type<tc>, window_params = [{transform_indices = @transform_0, window_bounds = array<i64: 64, 128>}, {pipeline_mode = #tpu.pipeline_mode<synchronous>, transform_indices = @transform_1, window_bounds = array<i64: 256, 64>}, {pipeline_mode = #tpu.pipeline_mode<synchronous>, transform_indices = @transform_2, window_bounds = array<i64: 256, 1>}, {pipeline_mode = #tpu.pipeline_mode<synchronous>, transform_indices = @transform_3, window_bounds = array<i64: 128, 256>}, {pipeline_mode = #tpu.pipeline_mode<synchronous>, transform_indices = @transform_4, window_bounds = array<i64: 128, 1>}, {pipeline_mode = #tpu.pipeline_mode<synchronous>, transform_indices = @transform_5, window_bounds = array<i64: 128, 1>}, {pipeline_mode = #tpu.pipeline_mode<synchronous>, transform_indices = @transform_6, window_bounds = array<i64: 1, 1>}, {transform_indices = @transform_7, window_bounds = array<i64: 1, 128>}]} {
    %c0 = arith.constant 0 : index
    %c0_0 = arith.constant 0 : index
    %0 = vector.load %arg1[%c0, %c0_0] : memref<64x128xbf16, #tpu.memory_space<vmem>>, vector<64x128xbf16>
    %c0_1 = arith.constant 0 : index
    %c0_2 = arith.constant 0 : index
    %1 = vector.load %arg2[%c0_1, %c0_2] : memref<256x64xbf16, #tpu.memory_space<vmem>>, vector<256x64xbf16>
    %cst = arith.constant dense<0.000000e+00> : vector<256x128xf32>
    %2 = tpu.matmul %1, %0, %cst {dimension_numbers = #tpu.dot_dimension_numbers<[1], [0], [0], [1], [0, 0, 1, 1], [], []>} : vector<256x64xbf16>, vector<64x128xbf16>, vector<256x128xf32> -> vector<256x128xf32>
    %c0_3 = arith.constant 0 : index
    %c0_4 = arith.constant 0 : index
    %3 = vector.load %arg3[%c0_3, %c0_4] : memref<256x1xf32, #tpu.memory_space<vmem>>, vector<256x1xf32>
    %4 = vector.broadcast %3 : vector<256x1xf32> to vector<256x128xf32>
    %5 = arith.addf %2, %4 : vector<256x128xf32>
    %cst_5 = arith.constant 0.000000e+00 : f32
    %6 = vector.broadcast %cst_5 : f32 to vector<256x128xf32>
    %7 = arith.maximumf %5, %6 : vector<256x128xf32>
    %c0_6 = arith.constant 0 : index
    %c0_7 = arith.constant 0 : index
    %8 = vector.load %arg4[%c0_6, %c0_7] : memref<128x256xbf16, #tpu.memory_space<vmem>>, vector<128x256xbf16>
    %9 = arith.truncf %7 : vector<256x128xf32> to vector<256x128xbf16>
    %cst_8 = arith.constant dense<0.000000e+00> : vector<128x128xf32>
    %10 = tpu.matmul %8, %9, %cst_8 {dimension_numbers = #tpu.dot_dimension_numbers<[1], [0], [0], [1], [0, 0, 1, 1], [], []>} : vector<128x256xbf16>, vector<256x128xbf16>, vector<128x128xf32> -> vector<128x128xf32>
    %c0_9 = arith.constant 0 : index
    %c0_10 = arith.constant 0 : index
    %11 = vector.load %arg5[%c0_9, %c0_10] : memref<128x1xf32, #tpu.memory_space<vmem>>, vector<128x1xf32>
    %12 = vector.broadcast %11 : vector<128x1xf32> to vector<128x128xf32>
    %13 = arith.addf %10, %12 : vector<128x128xf32>
    %c0_11 = arith.constant 0 : index
    %c0_12 = arith.constant 0 : index
    %14 = vector.load %arg6[%c0_11, %c0_12] : memref<128x1xf32, #tpu.memory_space<vmem>>, vector<128x1xf32>
    %15 = vector.broadcast %14 : vector<128x1xf32> to vector<128x128xf32>
    %16 = arith.mulf %13, %15 : vector<128x128xf32>
    %cst_13 = arith.constant dense<0.000000e+00> : vector<128xf32>
    %17 = vector.multi_reduction <add>, %16, %cst_13 [0] : vector<128x128xf32> to vector<128xf32>
    %18 = vector.shape_cast %17 : vector<128xf32> to vector<1x128xf32>
    %c0_14 = arith.constant 0 : index
    %c0_15 = arith.constant 0 : index
    %19 = vector.load %arg7[%c0_14, %c0_15] : memref<1x1xf32, #tpu.memory_space<vmem>>, vector<1x1xf32>
    %20 = vector.broadcast %19 : vector<1x1xf32> to vector<1x128xf32>
    %21 = arith.addf %18, %20 : vector<1x128xf32>
    %22 = arith.negf %21 : vector<1x128xf32>
    %23 = math.exp %22 : vector<1x128xf32>
    %cst_16 = arith.constant 1.000000e+00 : f32
    %24 = vector.broadcast %cst_16 : f32 to vector<1x128xf32>
    %25 = arith.addf %24, %23 : vector<1x128xf32>
    %26 = arith.divf %24, %25 : vector<1x128xf32>
    %c0_17 = arith.constant 0 : index
    %c0_18 = arith.constant 0 : index
    %27 = vector.load %arg8[%c0_17, %c0_18] : memref<1x128xf32, #tpu.memory_space<vmem>>, vector<1x128xf32>
    tpu.vector_store %arg8[%c0_17, %c0_18], %26 {strides = array<i32>} : memref<1x128xf32, #tpu.memory_space<vmem>>, vector<1x128xf32>,
    return
  }
  func.func @transform_0(%arg0: i32) -> (i32, i32) {
    %c0_i32 = arith.constant 0 : i32
    %c0_i32_0 = arith.constant 0 : i32
    return %c0_i32, %arg0 : i32, i32
  }
  func.func @transform_1(%arg0: i32) -> (i32, i32) {
    %c0_i32 = arith.constant 0 : i32
    %c0_i32_0 = arith.constant 0 : i32
    %c0_i32_1 = arith.constant 0 : i32
    return %c0_i32, %c0_i32_0 : i32, i32
  }
  func.func @transform_2(%arg0: i32) -> (i32, i32) {
    %c0_i32 = arith.constant 0 : i32
    %c0_i32_0 = arith.constant 0 : i32
    %c0_i32_1 = arith.constant 0 : i32
    return %c0_i32, %c0_i32_0 : i32, i32
  }
  func.func @transform_3(%arg0: i32) -> (i32, i32) {
    %c0_i32 = arith.constant 0 : i32
    %c0_i32_0 = arith.constant 0 : i32
    %c0_i32_1 = arith.constant 0 : i32
    return %c0_i32, %c0_i32_0 : i32, i32
  }
  func.func @transform_4(%arg0: i32) -> (i32, i32) {
    %c0_i32 = arith.constant 0 : i32
    %c0_i32_0 = arith.constant 0 : i32
    %c0_i32_1 = arith.constant 0 : i32
    return %c0_i32, %c0_i32_0 : i32, i32
  }
  func.func @transform_5(%arg0: i32) -> (i32, i32) {
    %c0_i32 = arith.constant 0 : i32
    %c0_i32_0 = arith.constant 0 : i32
    %c0_i32_1 = arith.constant 0 : i32
    return %c0_i32, %c0_i32_0 : i32, i32
  }
  func.func @transform_6(%arg0: i32) -> (i32, i32) {
    %c0_i32 = arith.constant 0 : i32
    %c0_i32_0 = arith.constant 0 : i32
    %c0_i32_1 = arith.constant 0 : i32
    return %c0_i32, %c0_i32_0 : i32, i32
  }
  func.func @transform_7(%arg0: i32) -> (i32, i32) {
    %c0_i32 = arith.constant 0 : i32
    %c0_i32_0 = arith.constant 0 : i32
    return %c0_i32, %arg0 : i32, i32
  }
}

</mosaic_0001>

<llo_original>
// kernel: tpu_custom_call.1
$region0: #{tpu_custom_call.1}
  #allocation0 [shape = 'u32[]', space=smem, size = 0x4, offset = 0x4, fixed_abs, tag = 'smem constant byte address 0x4 - core index']
  #allocation1 [shape = 'u32[72,128]{1,0:T(1,128)}', space=vmem, size = 0x9000, scoped, tag = 'internal scratch']
  #allocation2 [shape = 'f32[1,1]{1,0:T(1,128)S(1)}', space=vmem, size = 0x200, scoped, tag = 'scoped memory for tpu_custom_call.1']
  %s0 = inlined_call_operand.vmem [shape: bf16[64,128], index: 0, kind: input, shape index: {}]
  %s1 = inlined_call_operand.vmem [shape: bf16[256,64], index: 1, kind: input, shape index: {}]
  %s2 = inlined_call_operand.vmem [shape: f32[256,1], index: 2, kind: input, shape index: {}]
  %s3 = inlined_call_operand.vmem [shape: bf16[128,256], index: 3, kind: input, shape index: {}]
  %s4 = inlined_call_operand.vmem [shape: f32[128,1], index: 4, kind: input, shape index: {}]
  %s5 = inlined_call_operand.vmem [shape: f32[128,1], index: 5, kind: input, shape index: {}]
  %s6 = inlined_call_operand.<no memory space> [shape: f32[1,1], index: 6, kind: input, shape index: {}]
  %s7 = inlined_call_operand.hbm [shape: f32[1,128], index: 7, kind: output, shape index: {}]
  %s8 = sld [smem:[#allocation0]]
  $region38: #{tpu_custom_call.1} parent=0
    _
  %s10 = ssub.s32 1, %s8
  %s11 = scalar_select 0, %s10, %s8
  %v12 = vstv %s6
  %13 = vst [vmem:[#allocation2] sm:$0x1] %v12
  $region1: #{tpu_custom_call.1} parent=0
    #allocation3 [shape = 'u8[512]{0}', space=vmem, size = 0x400, scoped, tag = 'output window, operand 0, single buffered']
    #allocation4 [shape = 's32[1]{0}', space=sflag, size = 0x4, scoped, tag = 'scoped memory for tpu_custom_call.1']
    %14 = vsyncpa [#allocation4], 0
    // Predicated region
    $region2: #{tpu_custom_call.1} parent=1 // pred_check
      _
    $region3: #{tpu_custom_call.1} parent=1 // pred_check_branch
      %16 = sbr.rel (0) target = $region5
    $region4: #{tpu_custom_call.1} parent=1 // pred_region
      _
    $region5: #{tpu_custom_call.1} parent=1 // pred_fallthru
      _
    // Predicated region
    $region6: #{tpu_custom_call.1} parent=1 // pred_check
      _
    $region7: #{tpu_custom_call.1} parent=1 // pred_check_branch
      %18 = sbr.rel (0) target = $region9
    $region8: #{tpu_custom_call.1} parent=1 // pred_region
      _
    $region9: #{tpu_custom_call.1} parent=1 // pred_fallthru
      _
    // Predicated region
    $region10: #{tpu_custom_call.1} parent=1 // pred_check
      _
    $region11: #{tpu_custom_call.1} parent=1 // pred_check_branch
      %20 = sbr.rel (0) target = $region13
    $region12: #{tpu_custom_call.1} parent=1 // pred_region
      _
    $region13: #{tpu_custom_call.1} parent=1 // pred_fallthru
      _
    // Predicated region
    $region14: #{tpu_custom_call.1} parent=1 // pred_check
      _
    $region15: #{tpu_custom_call.1} parent=1 // pred_check_branch
      %22 = sbr.rel (0) target = $region17
    $region16: #{tpu_custom_call.1} parent=1 // pred_region
      _
    $region17: #{tpu_custom_call.1} parent=1 // pred_fallthru
      _
    // Predicated region
    $region18: #{tpu_custom_call.1} parent=1 // pred_check
      _
    $region19: #{tpu_custom_call.1} parent=1 // pred_check_branch
      %24 = sbr.rel (0) target = $region21
    $region20: #{tpu_custom_call.1} parent=1 // pred_region
      _
    $region21: #{tpu_custom_call.1} parent=1 // pred_fallthru
      _
    // Predicated region
    $region22: #{tpu_custom_call.1} parent=1 // pred_check
      _
    $region23: #{tpu_custom_call.1} parent=1 // pred_check_branch
      %26 = sbr.rel (0) target = $region25
    $region24: #{tpu_custom_call.1} parent=1 // pred_region
      _
    $region25: #{tpu_custom_call.1} parent=1 // pred_fallthru
      _
    // Predicated region
    $region26: #{tpu_custom_call.1} parent=1 // pred_check
      _
    $region27: #{tpu_custom_call.1} parent=1 // pred_check_branch
      %28 = sbr.rel (0) target = $region29
    $region28: #{tpu_custom_call.1} parent=1 // pred_region
      _
    $region29: #{tpu_custom_call.1} parent=1 // pred_fallthru
      _
    %v30 = vld [vmem:[%s0] sm:$0xf]
    %v31 = vld [vmem:[%s0 + $0x4] sm:$0xf]
    %v32 = vld [vmem:[%s0 + $0x8] sm:$0xf]
    %v33 = vld [vmem:[%s0 + $0xc] sm:$0xf]
    %v34 = vld [vmem:[%s0 + $0x10] sm:$0xf]
    %v35 = vld [vmem:[%s0 + $0x14] sm:$0xf]
    %v36 = vld [vmem:[%s0 + $0x18] sm:$0xf]
    %v37 = vld [vmem:[%s0 + $0x1c] sm:$0xf]
    %v38 = vld [vmem:[%s1] sm:$0xf]
    %v39 = vld [vmem:[%s1 + $0x4] sm:$0xf]
    %v40 = vld [vmem:[%s1 + $0x8] sm:$0xf]
    %v41 = vld [vmem:[%s1 + $0xc] sm:$0xf]
    %v42 = vld [vmem:[%s1 + $0x10] sm:$0xf]
    %v43 = vld [vmem:[%s1 + $0x14] sm:$0xf]
    %v44 = vld [vmem:[%s1 + $0x18] sm:$0xf]
    %v45 = vld [vmem:[%s1 + $0x1c] sm:$0xf]
    %v46 = vld [vmem:[%s1 + $0x20] sm:$0xf]
    %v47 = vld [vmem:[%s1 + $0x24] sm:$0xf]
    %v48 = vld [vmem:[%s1 + $0x28] sm:$0xf]
    %v49 = vld [vmem:[%s1 + $0x2c] sm:$0xf]
    %v50 = vld [vmem:[%s1 + $0x30] sm:$0xf]
    %v51 = vld [vmem:[%s1 + $0x34] sm:$0xf]
    %v52 = vld [vmem:[%s1 + $0x38] sm:$0xf]
    %v53 = vld [vmem:[%s1 + $0x3c] sm:$0xf]
    %v54 = vld [vmem:[%s1 + $0x40] sm:$0xf]
    %v55 = vld [vmem:[%s1 + $0x44] sm:$0xf]
    %v56 = vld [vmem:[%s1 + $0x48] sm:$0xf]
    %v57 = vld [vmem:[%s1 + $0x4c] sm:$0xf]
    %v58 = vld [vmem:[%s1 + $0x50] sm:$0xf]
    %v59 = vld [vmem:[%s1 + $0x54] sm:$0xf]
    %v60 = vld [vmem:[%s1 + $0x58] sm:$0xf]
    %v61 = vld [vmem:[%s1 + $0x5c] sm:$0xf]
    %v62 = vld [vmem:[%s1 + $0x60] sm:$0xf]
    %v63 = vld [vmem:[%s1 + $0x64] sm:$0xf]
    %v64 = vld [vmem:[%s1 + $0x68] sm:$0xf]
    %v65 = vld [vmem:[%s1 + $0x6c] sm:$0xf]
    %v66 = vld [vmem:[%s1 + $0x70] sm:$0xf]
    %v67 = vld [vmem:[%s1 + $0x74] sm:$0xf]
    %v68 = vld [vmem:[%s1 + $0x78] sm:$0xf]
    %v69 = vld [vmem:[%s1 + $0x7c] sm:$0xf]
    %v70 = vld [vmem:[%s2] sm:$0xff]
    %v71 = vld [vmem:[%s2 + $0x8] sm:$0xff]
    %v72 = vld [vmem:[%s2 + $0x10] sm:$0xff]
    %v73 = vld [vmem:[%s2 + $0x18] sm:$0xff]
    %v74 = vld [vmem:[%s2 + $0x20] sm:$0xff]
    %v75 = vld [vmem:[%s2 + $0x28] sm:$0xff]
    %v76 = vld [vmem:[%s2 + $0x30] sm:$0xff]
    %v77 = vld [vmem:[%s2 + $0x38] sm:$0xff]
    %v78 = vld [vmem:[%s2 + $0x40] sm:$0xff]
    %v79 = vld [vmem:[%s2 + $0x48] sm:$0xff]
    %v80 = vld [vmem:[%s2 + $0x50] sm:$0xff]
    %v81 = vld [vmem:[%s2 + $0x58] sm:$0xff]
    %v82 = vld [vmem:[%s2 + $0x60] sm:$0xff]
    %v83 = vld [vmem:[%s2 + $0x68] sm:$0xff]
    %v84 = vld [vmem:[%s2 + $0x70] sm:$0xff]
    %v85 = vld [vmem:[%s2 + $0x78] sm:$0xff]
    %v86 = vld [vmem:[%s2 + $0x80] sm:$0xff]
    %v87 = vld [vmem:[%s2 + $0x88] sm:$0xff]
    %v88 = vld [vmem:[%s2 + $0x90] sm:$0xff]
    %v89 = vld [vmem:[%s2 + $0x98] sm:$0xff]
    %v90 = vld [vmem:[%s2 + $0xa0] sm:$0xff]
    %v91 = vld [vmem:[%s2 + $0xa8] sm:$0xff]
    %v92 = vld [vmem:[%s2 + $0xb0] sm:$0xff]
    %v93 = vld [vmem:[%s2 + $0xb8] sm:$0xff]
    %v94 = vld [vmem:[%s2 + $0xc0] sm:$0xff]
    %v95 = vld [vmem:[%s2 + $0xc8] sm:$0xff]
    %v96 = vld [vmem:[%s2 + $0xd0] sm:$0xff]
    %v97 = vld [vmem:[%s2 + $0xd8] sm:$0xff]
    %v98 = vld [vmem:[%s2 + $0xe0] sm:$0xff]
    %v99 = vld [vmem:[%s2 + $0xe8] sm:$0xff]
    %v100 = vld [vmem:[%s2 + $0xf0] sm:$0xff]
    %v101 = vld [vmem:[%s2 + $0xf8] sm:$0xff]
    %103 = vset.pattern.permute.xlu0 0
    %104 = vperm.xlu0 %103, %v70
    %v105 = vpop.permute.xlu0 %104
    %108 = vset.pattern.permute.xlu0 0
    %109 = vperm.xlu0 %108, %v71
    %v110 = vpop.permute.xlu0 %109
    %113 = vset.pattern.permute.xlu0 0
    %114 = vperm.xlu0 %113, %v72
    %v115 = vpop.permute.xlu0 %114
    %118 = vset.pattern.permute.xlu0 0
    %119 = vperm.xlu0 %118, %v73
    %v120 = vpop.permute.xlu0 %119
    %123 = vset.pattern.permute.xlu0 0
    %124 = vperm.xlu0 %123, %v74
    %v125 = vpop.permute.xlu0 %124
    %128 = vset.pattern.permute.xlu0 0
    %129 = vperm.xlu0 %128, %v75
    %v130 = vpop.permute.xlu0 %129
    %133 = vset.pattern.permute.xlu0 0
    %134 = vperm.xlu0 %133, %v76
    %v135 = vpop.permute.xlu0 %134
    %138 = vset.pattern.permute.xlu0 0
    %139 = vperm.xlu0 %138, %v77
    %v140 = vpop.permute.xlu0 %139
    %143 = vset.pattern.permute.xlu0 0
    %144 = vperm.xlu0 %143, %v78
    %v145 = vpop.permute.xlu0 %144
    %148 = vset.pattern.permute.xlu0 0
    %149 = vperm.xlu0 %148, %v79
    %v150 = vpop.permute.xlu0 %149
    %153 = vset.pattern.permute.xlu0 0
    %154 = vperm.xlu0 %153, %v80
    %v155 = vpop.permute.xlu0 %154
    %158 = vset.pattern.permute.xlu0 0
    %159 = vperm.xlu0 %158, %v81
    %v160 = vpop.permute.xlu0 %159
    %163 = vset.pattern.permute.xlu0 0
    %164 = vperm.xlu0 %163, %v82
    %v165 = vpop.permute.xlu0 %164
    %168 = vset.pattern.permute.xlu0 0
    %169 = vperm.xlu0 %168, %v83
    %v170 = vpop.permute.xlu0 %169
    %173 = vset.pattern.permute.xlu0 0
    %174 = vperm.xlu0 %173, %v84
    %v175 = vpop.permute.xlu0 %174
    %178 = vset.pattern.permute.xlu0 0
    %179 = vperm.xlu0 %178, %v85
    %v180 = vpop.permute.xlu0 %179
    %183 = vset.pattern.permute.xlu0 0
    %184 = vperm.xlu0 %183, %v86
    %v185 = vpop.permute.xlu0 %184
    %188 = vset.pattern.permute.xlu0 0
    %189 = vperm.xlu0 %188, %v87
    %v190 = vpop.permute.xlu0 %189
    %193 = vset.pattern.permute.xlu0 0
    %194 = vperm.xlu0 %193, %v88
    %v195 = vpop.permute.xlu0 %194
    %198 = vset.pattern.permute.xlu0 0
    %199 = vperm.xlu0 %198, %v89
    %v200 = vpop.permute.xlu0 %199
    %203 = vset.pattern.permute.xlu0 0
    %204 = vperm.xlu0 %203, %v90
    %v205 = vpop.permute.xlu0 %204
    %208 = vset.pattern.permute.xlu0 0
    %209 = vperm.xlu0 %208, %v91
    %v210 = vpop.permute.xlu0 %209
    %213 = vset.pattern.permute.xlu0 0
    %214 = vperm.xlu0 %213, %v92
    %v215 = vpop.permute.xlu0 %214
    %218 = vset.pattern.permute.xlu0 0
    %219 = vperm.xlu0 %218, %v93
    %v220 = vpop.permute.xlu0 %219
    %223 = vset.pattern.permute.xlu0 0
    %224 = vperm.xlu0 %223, %v94
    %v225 = vpop.permute.xlu0 %224
    %228 = vset.pattern.permute.xlu0 0
    %229 = vperm.xlu0 %228, %v95
    %v230 = vpop.permute.xlu0 %229
    %233 = vset.pattern.permute.xlu0 0
    %234 = vperm.xlu0 %233, %v96
    %v235 = vpop.permute.xlu0 %234
    %238 = vset.pattern.permute.xlu0 0
    %239 = vperm.xlu0 %238, %v97
    %v240 = vpop.permute.xlu0 %239
    %243 = vset.pattern.permute.xlu0 0
    %244 = vperm.xlu0 %243, %v98
    %v245 = vpop.permute.xlu0 %244
    %248 = vset.pattern.permute.xlu0 0
    %249 = vperm.xlu0 %248, %v99
    %v250 = vpop.permute.xlu0 %249
    %253 = vset.pattern.permute.xlu0 0
    %254 = vperm.xlu0 %253, %v100
    %v255 = vpop.permute.xlu0 %254
    %258 = vset.pattern.permute.xlu0 0
    %259 = vperm.xlu0 %258, %v101
    %v260 = vpop.permute.xlu0 %259
    %v294 = vunpack.c.l.b16 %v38
    %v295 = vunpack.c.l.b16 %v39
    %v296 = vunpack.c.l.b16 %v40
    %v297 = vunpack.c.l.b16 %v41
    %v298 = vunpack.c.l.b16 %v42
    %v299 = vunpack.c.l.b16 %v43
    %v300 = vunpack.c.l.b16 %v44
    %v301 = vunpack.c.l.b16 %v45
    %v302 = vunpack.c.l.b16 %v46
    %v303 = vunpack.c.l.b16 %v47
    %v304 = vunpack.c.l.b16 %v48
    %v305 = vunpack.c.l.b16 %v49
    %v306 = vunpack.c.l.b16 %v50
    %v307 = vunpack.c.l.b16 %v51
    %v308 = vunpack.c.l.b16 %v52
    %v309 = vunpack.c.l.b16 %v53
    %v310 = vunpack.c.l.b16 %v54
    %v311 = vunpack.c.l.b16 %v55
    %v312 = vunpack.c.l.b16 %v56
    %v313 = vunpack.c.l.b16 %v57
    %v314 = vunpack.c.l.b16 %v58
    %v315 = vunpack.c.l.b16 %v59
    %v316 = vunpack.c.l.b16 %v60
    %v317 = vunpack.c.l.b16 %v61
    %v318 = vunpack.c.l.b16 %v62
    %v319 = vunpack.c.l.b16 %v63
    %v320 = vunpack.c.l.b16 %v64
    %v321 = vunpack.c.l.b16 %v65
    %v322 = vunpack.c.l.b16 %v66
    %v323 = vunpack.c.l.b16 %v67
    %v324 = vunpack.c.l.b16 %v68
    %v325 = vunpack.c.l.b16 %v69
    %v326 = vpack.c.b16 %v295, %v294
    %v327 = vpack.c.b16 %v297, %v296
    %v328 = vpack.c.b16 %v299, %v298
    %v329 = vpack.c.b16 %v301, %v300
    %v330 = vpack.c.b16 %v303, %v302
    %v331 = vpack.c.b16 %v305, %v304
    %v332 = vpack.c.b16 %v307, %v306
    %v333 = vpack.c.b16 %v309, %v308
    %v334 = vpack.c.b16 %v311, %v310
    %v335 = vpack.c.b16 %v313, %v312
    %v336 = vpack.c.b16 %v315, %v314
    %v337 = vpack.c.b16 %v317, %v316
    %v338 = vpack.c.b16 %v319, %v318
    %v339 = vpack.c.b16 %v321, %v320
    %v340 = vpack.c.b16 %v323, %v322
    %v341 = vpack.c.b16 %v325, %v324
    %v350 = vunpack.c.l.b16 %v30
    %v351 = vunpack.c.l.b16 %v31
    %v352 = vunpack.c.l.b16 %v32
    %v353 = vunpack.c.l.b16 %v33
    %v354 = vunpack.c.l.b16 %v34
    %v355 = vunpack.c.l.b16 %v35
    %v356 = vunpack.c.l.b16 %v36
    %v357 = vunpack.c.l.b16 %v37
    %v358 = vpack.c.b16 %v351, %v350
    %v359 = vpack.c.b16 %v353, %v352
    %v360 = vpack.c.b16 %v355, %v354
    %v361 = vpack.c.b16 %v357, %v356
    %vm366 = vcmask 523264
    %v368 = vsel %vm366, %v326, 0
    %v371 = vsel %vm366, %v327, 0
    %v374 = vsel %vm366, %v328, 0
    %v377 = vsel %vm366, %v329, 0
    %v380 = vsel %vm366, %v330, 0
    %v383 = vsel %vm366, %v331, 0
    %v386 = vsel %vm366, %v332, 0
    %v389 = vsel %vm366, %v333, 0
    %v392 = vsel %vm366, %v334, 0
    %v395 = vsel %vm366, %v335, 0
    %v398 = vsel %vm366, %v336, 0
    %v401 = vsel %vm366, %v337, 0
    %v404 = vsel %vm366, %v338, 0
    %v407 = vsel %vm366, %v339, 0
    %v410 = vsel %vm366, %v340, 0
    %v413 = vsel %vm366, %v341, 0
    %415 = vmatpush.bf16.msra.mxu0 0
    %416 = vmatpush.bf16.msra.mxu0 0
    %417 = vmatpush.bf16.msra.mxu0 0
    %418 = vmatpush.bf16.msra.mxu0 0
    %419 = vmatpush.bf16.msra.mxu0 %v361
    %420 = vmatpush.bf16.msra.mxu0 %v360
    %421 = vmatpush.bf16.msra.mxu0 %v359
    %422 = vmatpush.bf16.msra.mxu0 %v358
    %423 = vmatmul.bf16.gmra.mxu0 %v368
    %v424 = vpop.f32.mrf.mxu0
    %v425 = vadd.f32 %v105, %v424
    %v426 = vpop.f32.mrf.mxu0
    %v427 = vadd.f32 %v110, %v426
    %428 = vmatmul.bf16.gmra.mxu0 %v371
    %v429 = vpop.f32.mrf.mxu0
    %v430 = vadd.f32 %v115, %v429
    %v431 = vpop.f32.mrf.mxu0
    %v432 = vadd.f32 %v120, %v431
    %433 = vmatmul.bf16.gmra.mxu0 %v374
    %v434 = vpop.f32.mrf.mxu0
    %v435 = vadd.f32 %v125, %v434
    %v436 = vpop.f32.mrf.mxu0
    %v437 = vadd.f32 %v130, %v436
    %438 = vmatmul.bf16.gmra.mxu0 %v377
    %v439 = vpop.f32.mrf.mxu0
    %v440 = vadd.f32 %v135, %v439
    %v441 = vpop.f32.mrf.mxu0
    %v442 = vadd.f32 %v140, %v441
    %443 = vmatmul.bf16.gmra.mxu0 %v380
    %v444 = vpop.f32.mrf.mxu0
    %v445 = vadd.f32 %v145, %v444
    %v446 = vpop.f32.mrf.mxu0
    %v447 = vadd.f32 %v150, %v446
    %448 = vmatmul.bf16.gmra.mxu0 %v383
    %v449 = vpop.f32.mrf.mxu0
    %v450 = vadd.f32 %v155, %v449
    %v451 = vpop.f32.mrf.mxu0
    %v452 = vadd.f32 %v160, %v451
    %453 = vmatmul.bf16.gmra.mxu0 %v386
    %v454 = vpop.f32.mrf.mxu0
    %v455 = vadd.f32 %v165, %v454
    %v456 = vpop.f32.mrf.mxu0
    %v457 = vadd.f32 %v170, %v456
    %458 = vmatmul.bf16.gmra.mxu0 %v389
    %v459 = vpop.f32.mrf.mxu0
    %v460 = vadd.f32 %v175, %v459
    %v461 = vpop.f32.mrf.mxu0
    %v462 = vadd.f32 %v180, %v461
    %463 = vmatmul.bf16.gmra.mxu0 %v392
    %v464 = vpop.f32.mrf.mxu0
    %v465 = vadd.f32 %v185, %v464
    %v466 = vpop.f32.mrf.mxu0
    %v467 = vadd.f32 %v190, %v466
    %468 = vmatmul.bf16.gmra.mxu0 %v395
    %v469 = vpop.f32.mrf.mxu0
    %v470 = vadd.f32 %v195, %v469
    %v471 = vpop.f32.mrf.mxu0
    %v472 = vadd.f32 %v200, %v471
    %473 = vmatmul.bf16.gmra.mxu0 %v398
    %v474 = vpop.f32.mrf.mxu0
    %v475 = vadd.f32 %v205, %v474
    %v476 = vpop.f32.mrf.mxu0
    %v477 = vadd.f32 %v210, %v476
    %478 = vmatmul.bf16.gmra.mxu0 %v401
    %v479 = vpop.f32.mrf.mxu0
    %v480 = vadd.f32 %v215, %v479
    %v481 = vpop.f32.mrf.mxu0
    %v482 = vadd.f32 %v220, %v481
    %483 = vmatmul.bf16.gmra.mxu0 %v404
    %v484 = vpop.f32.mrf.mxu0
    %v485 = vadd.f32 %v225, %v484
    %v486 = vpop.f32.mrf.mxu0
    %v487 = vadd.f32 %v230, %v486
    %488 = vmatmul.bf16.gmra.mxu0 %v407
    %v489 = vpop.f32.mrf.mxu0
    %v490 = vadd.f32 %v235, %v489
    %v491 = vpop.f32.mrf.mxu0
    %v492 = vadd.f32 %v240, %v491
    %493 = vmatmul.bf16.gmra.mxu0 %v410
    %v494 = vpop.f32.mrf.mxu0
    %v495 = vadd.f32 %v245, %v494
    %v496 = vpop.f32.mrf.mxu0
    %v497 = vadd.f32 %v250, %v496
    %498 = vmatmul.bf16.gmra.mxu0 %v413
    %v499 = vpop.f32.mrf.mxu0
    %v500 = vadd.f32 %v255, %v499
    %v501 = vpop.f32.mrf.mxu0
    %v502 = vadd.f32 %v260, %v501
    %503 = vdwg.mxu0
    %v504 = vmax.f32 %v425, 0.0
    %v505 = vmax.f32 %v427, 0.0
    %v506 = vmax.f32 %v430, 0.0
    %v507 = vmax.f32 %v432, 0.0
    %v508 = vmax.f32 %v435, 0.0
    %v509 = vmax.f32 %v437, 0.0
    %v510 = vmax.f32 %v440, 0.0
    %v511 = vmax.f32 %v442, 0.0
    %v512 = vmax.f32 %v445, 0.0
    %v513 = vmax.f32 %v447, 0.0
    %v514 = vmax.f32 %v450, 0.0
    %v515 = vmax.f32 %v452, 0.0
    %v516 = vmax.f32 %v455, 0.0
    %v517 = vmax.f32 %v457, 0.0
    %v518 = vmax.f32 %v460, 0.0
    %v519 = vmax.f32 %v462, 0.0
    %v520 = vmax.f32 %v465, 0.0
    %v521 = vmax.f32 %v467, 0.0
    %v522 = vmax.f32 %v470, 0.0
    %v523 = vmax.f32 %v472, 0.0
    %v524 = vmax.f32 %v475, 0.0
    %v525 = vmax.f32 %v477, 0.0
    %v526 = vmax.f32 %v480, 0.0
    %v527 = vmax.f32 %v482, 0.0
    %v528 = vmax.f32 %v485, 0.0
    %v529 = vmax.f32 %v487, 0.0
    %v530 = vmax.f32 %v490, 0.0
    %v531 = vmax.f32 %v492, 0.0
    %v532 = vmax.f32 %v495, 0.0
    %v533 = vmax.f32 %v497, 0.0
    %v534 = vmax.f32 %v500, 0.0
    %v535 = vmax.f32 %v502, 0.0
    %v536 = vld [vmem:[%s3] sm:$0xff]
    %v537 = vld [vmem:[%s3 + $0x8] sm:$0xff]
    %v538 = vld [vmem:[%s3 + $0x10] sm:$0xff]
    %v539 = vld [vmem:[%s3 + $0x18] sm:$0xff]
    %v540 = vld [vmem:[%s3 + $0x20] sm:$0xff]
    %v541 = vld [vmem:[%s3 + $0x28] sm:$0xff]
    %v542 = vld [vmem:[%s3 + $0x30] sm:$0xff]
    %v543 = vld [vmem:[%s3 + $0x38] sm:$0xff]
    %v544 = vld [vmem:[%s3 + $0x40] sm:$0xff]
    %v545 = vld [vmem:[%s3 + $0x48] sm:$0xff]
    %v546 = vld [vmem:[%s3 + $0x50] sm:$0xff]
    %v547 = vld [vmem:[%s3 + $0x58] sm:$0xff]
    %v548 = vld [vmem:[%s3 + $0x60] sm:$0xff]
    %v549 = vld [vmem:[%s3 + $0x68] sm:$0xff]
    %v550 = vld [vmem:[%s3 + $0x70] sm:$0xff]
    %v551 = vld [vmem:[%s3 + $0x78] sm:$0xff]
    %v552 = vpack.c.bf16 %v505, %v504
    %v553 = vpack.c.bf16 %v507, %v506
    %v554 = vpack.c.bf16 %v509, %v508
    %v555 = vpack.c.bf16 %v511, %v510
    %v556 = vpack.c.bf16 %v513, %v512
    %v557 = vpack.c.bf16 %v515, %v514
    %v558 = vpack.c.bf16 %v517, %v516
    %v559 = vpack.c.bf16 %v519, %v518
    %v560 = vpack.c.bf16 %v521, %v520
    %v561 = vpack.c.bf16 %v523, %v522
    %v562 = vpack.c.bf16 %v525, %v524
    %v563 = vpack.c.bf16 %v527, %v526
    %v564 = vpack.c.bf16 %v529, %v528
    %v565 = vpack.c.bf16 %v531, %v530
    %v566 = vpack.c.bf16 %v533, %v532
    %v567 = vpack.c.bf16 %v535, %v534
    %v568 = vld [vmem:[%s4] sm:$0xff]
    %v569 = vld [vmem:[%s4 + $0x8] sm:$0xff]
    %v570 = vld [vmem:[%s4 + $0x10] sm:$0xff]
    %v571 = vld [vmem:[%s4 + $0x18] sm:$0xff]
    %v572 = vld [vmem:[%s4 + $0x20] sm:$0xff]
    %v573 = vld [vmem:[%s4 + $0x28] sm:$0xff]
    %v574 = vld [vmem:[%s4 + $0x30] sm:$0xff]
    %v575 = vld [vmem:[%s4 + $0x38] sm:$0xff]
    %v576 = vld [vmem:[%s4 + $0x40] sm:$0xff]
    %v577 = vld [vmem:[%s4 + $0x48] sm:$0xff]
    %v578 = vld [vmem:[%s4 + $0x50] sm:$0xff]
    %v579 = vld [vmem:[%s4 + $0x58] sm:$0xff]
    %v580 = vld [vmem:[%s4 + $0x60] sm:$0xff]
    %v581 = vld [vmem:[%s4 + $0x68] sm:$0xff]
    %v582 = vld [vmem:[%s4 + $0x70] sm:$0xff]
    %v583 = vld [vmem:[%s4 + $0x78] sm:$0xff]
    %585 = vset.pattern.permute.xlu0 0
    %586 = vperm.xlu0 %585, %v568
    %v587 = vpop.permute.xlu0 %586
    %590 = vset.pattern.permute.xlu0 0
    %591 = vperm.xlu0 %590, %v569
    %v592 = vpop.permute.xlu0 %591
    %595 = vset.pattern.permute.xlu0 0
    %596 = vperm.xlu0 %595, %v570
    %v597 = vpop.permute.xlu0 %596
    %600 = vset.pattern.permute.xlu0 0
    %601 = vperm.xlu0 %600, %v571
    %v602 = vpop.permute.xlu0 %601
    %605 = vset.pattern.permute.xlu0 0
    %606 = vperm.xlu0 %605, %v572
    %v607 = vpop.permute.xlu0 %606
    %610 = vset.pattern.permute.xlu0 0
    %611 = vperm.xlu0 %610, %v573
    %v612 = vpop.permute.xlu0 %611
    %615 = vset.pattern.permute.xlu0 0
    %616 = vperm.xlu0 %615, %v574
    %v617 = vpop.permute.xlu0 %616
    %620 = vset.pattern.permute.xlu0 0
    %621 = vperm.xlu0 %620, %v575
    %v622 = vpop.permute.xlu0 %621
    %625 = vset.pattern.permute.xlu0 0
    %626 = vperm.xlu0 %625, %v576
    %v627 = vpop.permute.xlu0 %626
    %630 = vset.pattern.permute.xlu0 0
    %631 = vperm.xlu0 %630, %v577
    %v632 = vpop.permute.xlu0 %631
    %635 = vset.pattern.permute.xlu0 0
    %636 = vperm.xlu0 %635, %v578
    %v637 = vpop.permute.xlu0 %636
    %640 = vset.pattern.permute.xlu0 0
    %641 = vperm.xlu0 %640, %v579
    %v642 = vpop.permute.xlu0 %641
    %645 = vset.pattern.permute.xlu0 0
    %646 = vperm.xlu0 %645, %v580
    %v647 = vpop.permute.xlu0 %646
    %650 = vset.pattern.permute.xlu0 0
    %651 = vperm.xlu0 %650, %v581
    %v652 = vpop.permute.xlu0 %651
    %655 = vset.pattern.permute.xlu0 0
    %656 = vperm.xlu0 %655, %v582
    %v657 = vpop.permute.xlu0 %656
    %660 = vset.pattern.permute.xlu0 0
    %661 = vperm.xlu0 %660, %v583
    %v662 = vpop.permute.xlu0 %661
    %v680 = vunpack.c.l.b16 %v536
    %v681 = vunpack.c.h.b16 %v536
    %v682 = vunpack.c.l.b16 %v537
    %v683 = vunpack.c.h.b16 %v537
    %v684 = vunpack.c.l.b16 %v538
    %v685 = vunpack.c.h.b16 %v538
    %v686 = vunpack.c.l.b16 %v539
    %v687 = vunpack.c.h.b16 %v539
    %v688 = vunpack.c.l.b16 %v540
    %v689 = vunpack.c.h.b16 %v540
    %v690 = vunpack.c.l.b16 %v541
    %v691 = vunpack.c.h.b16 %v541
    %v692 = vunpack.c.l.b16 %v542
    %v693 = vunpack.c.h.b16 %v542
    %v694 = vunpack.c.l.b16 %v543
    %v695 = vunpack.c.h.b16 %v543
    %v696 = vunpack.c.l.b16 %v544
    %v697 = vunpack.c.h.b16 %v544
    %v698 = vunpack.c.l.b16 %v545
    %v699 = vunpack.c.h.b16 %v545
    %v700 = vunpack.c.l.b16 %v546
    %v701 = vunpack.c.h.b16 %v546
    %v702 = vunpack.c.l.b16 %v547
    %v703 = vunpack.c.h.b16 %v547
    %v704 = vunpack.c.l.b16 %v548
    %v705 = vunpack.c.h.b16 %v548
    %v706 = vunpack.c.l.b16 %v549
    %v707 = vunpack.c.h.b16 %v549
    %v708 = vunpack.c.l.b16 %v550
    %v709 = vunpack.c.h.b16 %v550
    %v710 = vunpack.c.l.b16 %v551
    %v711 = vunpack.c.h.b16 %v551
    %v712 = vpack.c.b16 %v682, %v680
    %v713 = vpack.c.b16 %v683, %v681
    %v714 = vpack.c.b16 %v686, %v684
    %v715 = vpack.c.b16 %v687, %v685
    %v716 = vpack.c.b16 %v690, %v688
    %v717 = vpack.c.b16 %v691, %v689
    %v718 = vpack.c.b16 %v694, %v692
    %v719 = vpack.c.b16 %v695, %v693
    %v720 = vpack.c.b16 %v698, %v696
    %v721 = vpack.c.b16 %v699, %v697
    %v722 = vpack.c.b16 %v702, %v700
    %v723 = vpack.c.b16 %v703, %v701
    %v724 = vpack.c.b16 %v706, %v704
    %v725 = vpack.c.b16 %v707, %v705
    %v726 = vpack.c.b16 %v710, %v708
    %v727 = vpack.c.b16 %v711, %v709
    %744 = vmatpush.bf16.msra.mxu0 %v559
    %745 = vmatpush.bf16.msra.mxu0 %v558
    %746 = vmatpush.bf16.msra.mxu0 %v557
    %747 = vmatpush.bf16.msra.mxu0 %v556
    %748 = vmatpush.bf16.msra.mxu0 %v555
    %749 = vmatpush.bf16.msra.mxu0 %v554
    %750 = vmatpush.bf16.msra.mxu0 %v553
    %751 = vmatpush.bf16.msra.mxu0 %v552
    %752 = vmatmul.bf16.gmra.mxu0 %v712
    %v753 = vpop.f32.mrf.mxu0
    %v754 = vadd.f32 %v587, %v753
    %v755 = vpop.f32.mrf.mxu0
    %v756 = vadd.f32 %v592, %v755
    %757 = vmatmul.bf16.gmra.mxu0 %v714
    %v758 = vpop.f32.mrf.mxu0
    %v759 = vadd.f32 %v597, %v758
    %v760 = vpop.f32.mrf.mxu0
    %v761 = vadd.f32 %v602, %v760
    %762 = vmatmul.bf16.gmra.mxu0 %v716
    %v763 = vpop.f32.mrf.mxu0
    %v764 = vadd.f32 %v607, %v763
    %v765 = vpop.f32.mrf.mxu0
    %v766 = vadd.f32 %v612, %v765
    %767 = vmatmul.bf16.gmra.mxu0 %v718
    %v768 = vpop.f32.mrf.mxu0
    %v769 = vadd.f32 %v617, %v768
    %v770 = vpop.f32.mrf.mxu0
    %v771 = vadd.f32 %v622, %v770
    %772 = vmatmul.bf16.gmra.mxu0 %v720
    %v773 = vpop.f32.mrf.mxu0
    %v774 = vadd.f32 %v627, %v773
    %v775 = vpop.f32.mrf.mxu0
    %v776 = vadd.f32 %v632, %v775
    %777 = vmatmul.bf16.gmra.mxu0 %v722
    %v778 = vpop.f32.mrf.mxu0
    %v779 = vadd.f32 %v637, %v778
    %v780 = vpop.f32.mrf.mxu0
    %v781 = vadd.f32 %v642, %v780
    %782 = vmatmul.bf16.gmra.mxu0 %v724
    %v783 = vpop.f32.mrf.mxu0
    %v784 = vadd.f32 %v647, %v783
    %v785 = vpop.f32.mrf.mxu0
    %v786 = vadd.f32 %v652, %v785
    %787 = vmatmul.bf16.gmra.mxu0 %v726
    %v788 = vpop.f32.mrf.mxu0
    %v789 = vadd.f32 %v657, %v788
    %v790 = vpop.f32.mrf.mxu0
    %v791 = vadd.f32 %v662, %v790
    %792 = vdwg.mxu0
    %793 = vmatpush.bf16.msra.mxu0 %v567
    %794 = vmatpush.bf16.msra.mxu0 %v566
    %795 = vmatpush.bf16.msra.mxu0 %v565
    %796 = vmatpush.bf16.msra.mxu0 %v564
    %797 = vmatpush.bf16.msra.mxu0 %v563
    %798 = vmatpush.bf16.msra.mxu0 %v562
    %799 = vmatpush.bf16.msra.mxu0 %v561
    %800 = vmatpush.bf16.msra.mxu0 %v560
    %801 = vmatmul.bf16.gmra.mxu0 %v713
    %v802 = vpop.f32.mrf.mxu0
    %v803 = vadd.f32 %v754, %v802
    %v804 = vpop.f32.mrf.mxu0
    %v805 = vadd.f32 %v756, %v804
    %806 = vmatmul.bf16.gmra.mxu0 %v715
    %v807 = vpop.f32.mrf.mxu0
    %v808 = vadd.f32 %v759, %v807
    %v809 = vpop.f32.mrf.mxu0
    %v810 = vadd.f32 %v761, %v809
    %811 = vmatmul.bf16.gmra.mxu0 %v717
    %v812 = vpop.f32.mrf.mxu0
    %v813 = vadd.f32 %v764, %v812
    %v814 = vpop.f32.mrf.mxu0
    %v815 = vadd.f32 %v766, %v814
    %816 = vmatmul.bf16.gmra.mxu0 %v719
    %v817 = vpop.f32.mrf.mxu0
    %v818 = vadd.f32 %v769, %v817
    %v819 = vpop.f32.mrf.mxu0
    %v820 = vadd.f32 %v771, %v819
    %821 = vmatmul.bf16.gmra.mxu0 %v721
    %v822 = vpop.f32.mrf.mxu0
    %v823 = vadd.f32 %v774, %v822
    %v824 = vpop.f32.mrf.mxu0
    %v825 = vadd.f32 %v776, %v824
    %826 = vmatmul.bf16.gmra.mxu0 %v723
    %v827 = vpop.f32.mrf.mxu0
    %v828 = vadd.f32 %v779, %v827
    %v829 = vpop.f32.mrf.mxu0
    %v830 = vadd.f32 %v781, %v829
    %831 = vmatmul.bf16.gmra.mxu0 %v725
    %v832 = vpop.f32.mrf.mxu0
    %v833 = vadd.f32 %v784, %v832
    %v834 = vpop.f32.mrf.mxu0
    %v835 = vadd.f32 %v786, %v834
    %836 = vmatmul.bf16.gmra.mxu0 %v727
    %v837 = vpop.f32.mrf.mxu0
    %v838 = vadd.f32 %v789, %v837
    %v839 = vpop.f32.mrf.mxu0
    %v840 = vadd.f32 %v791, %v839
    %841 = vdwg.mxu0
    %v842 = vld [vmem:[%s5] sm:$0xff]
    %v843 = vld [vmem:[%s5 + $0x8] sm:$0xff]
    %v844 = vld [vmem:[%s5 + $0x10] sm:$0xff]
    %v845 = vld [vmem:[%s5 + $0x18] sm:$0xff]
    %v846 = vld [vmem:[%s5 + $0x20] sm:$0xff]
    %v847 = vld [vmem:[%s5 + $0x28] sm:$0xff]
    %v848 = vld [vmem:[%s5 + $0x30] sm:$0xff]
    %v849 = vld [vmem:[%s5 + $0x38] sm:$0xff]
    %v850 = vld [vmem:[%s5 + $0x40] sm:$0xff]
    %v851 = vld [vmem:[%s5 + $0x48] sm:$0xff]
    %v852 = vld [vmem:[%s5 + $0x50] sm:$0xff]
    %v853 = vld [vmem:[%s5 + $0x58] sm:$0xff]
    %v854 = vld [vmem:[%s5 + $0x60] sm:$0xff]
    %v855 = vld [vmem:[%s5 + $0x68] sm:$0xff]
    %v856 = vld [vmem:[%s5 + $0x70] sm:$0xff]
    %v857 = vld [vmem:[%s5 + $0x78] sm:$0xff]
    %859 = vset.pattern.permute.xlu0 0
    %860 = vperm.xlu0 %859, %v842
    %v861 = vpop.permute.xlu0 %860
    %864 = vset.pattern.permute.xlu0 0
    %865 = vperm.xlu0 %864, %v843
    %v866 = vpop.permute.xlu0 %865
    %869 = vset.pattern.permute.xlu0 0
    %870 = vperm.xlu0 %869, %v844
    %v871 = vpop.permute.xlu0 %870
    %874 = vset.pattern.permute.xlu0 0
    %875 = vperm.xlu0 %874, %v845
    %v876 = vpop.permute.xlu0 %875
    %879 = vset.pattern.permute.xlu0 0
    %880 = vperm.xlu0 %879, %v846
    %v881 = vpop.permute.xlu0 %880
    %884 = vset.pattern.permute.xlu0 0
    %885 = vperm.xlu0 %884, %v847
    %v886 = vpop.permute.xlu0 %885
    %889 = vset.pattern.permute.xlu0 0
    %890 = vperm.xlu0 %889, %v848
    %v891 = vpop.permute.xlu0 %890
    %894 = vset.pattern.permute.xlu0 0
    %895 = vperm.xlu0 %894, %v849
    %v896 = vpop.permute.xlu0 %895
    %899 = vset.pattern.permute.xlu0 0
    %900 = vperm.xlu0 %899, %v850
    %v901 = vpop.permute.xlu0 %900
    %904 = vset.pattern.permute.xlu0 0
    %905 = vperm.xlu0 %904, %v851
    %v906 = vpop.permute.xlu0 %905
    %909 = vset.pattern.permute.xlu0 0
    %910 = vperm.xlu0 %909, %v852
    %v911 = vpop.permute.xlu0 %910
    %914 = vset.pattern.permute.xlu0 0
    %915 = vperm.xlu0 %914, %v853
    %v916 = vpop.permute.xlu0 %915
    %919 = vset.pattern.permute.xlu0 0
    %920 = vperm.xlu0 %919, %v854
    %v921 = vpop.permute.xlu0 %920
    %924 = vset.pattern.permute.xlu0 0
    %925 = vperm.xlu0 %924, %v855
    %v926 = vpop.permute.xlu0 %925
    %929 = vset.pattern.permute.xlu0 0
    %930 = vperm.xlu0 %929, %v856
    %v931 = vpop.permute.xlu0 %930
    %934 = vset.pattern.permute.xlu0 0
    %935 = vperm.xlu0 %934, %v857
    %v936 = vpop.permute.xlu0 %935
    %v938 = vmul.f32 %v803, %v861
    %v939 = vmul.f32 %v805, %v866
    %v940 = vmul.f32 %v808, %v871
    %v941 = vmul.f32 %v810, %v876
    %v942 = vmul.f32 %v813, %v881
    %v943 = vmul.f32 %v815, %v886
    %v944 = vmul.f32 %v818, %v891
    %v945 = vmul.f32 %v820, %v896
    %v946 = vmul.f32 %v823, %v901
    %v947 = vmul.f32 %v825, %v906
    %v948 = vmul.f32 %v828, %v911
    %v949 = vmul.f32 %v830, %v916
    %v950 = vmul.f32 %v833, %v921
    %v951 = vmul.f32 %v835, %v926
    %v952 = vmul.f32 %v838, %v931
    %v953 = vmul.f32 %v840, %v936
    %v954 = vadd.f32 %v938, %v939
    %v955 = vadd.f32 %v954, %v940
    %v956 = vadd.f32 %v955, %v941
    %v957 = vadd.f32 %v956, %v942
    %v958 = vadd.f32 %v957, %v943
    %v959 = vadd.f32 %v958, %v944
    %v960 = vadd.f32 %v959, %v945
    %v961 = vadd.f32 %v960, %v946
    %v962 = vadd.f32 %v961, %v947
    %v963 = vadd.f32 %v962, %v948
    %v964 = vadd.f32 %v963, %v949
    %v965 = vadd.f32 %v964, %v950
    %v966 = vadd.f32 %v965, %v951
    %v967 = vadd.f32 %v966, %v952
    %v968 = vadd.f32 %v967, %v953
    %v969 = vrot.slane %v968, 4
    %v970 = vadd.f32 %v968, %v969
    %v971 = vrot.slane %v970, 2
    %v972 = vadd.f32 %v970, %v971
    %v973 = vrot.slane %v972, 1
    %v974 = vadd.f32 %v972, %v973
    %v975 = vld [vmem:[#allocation2] sm:$0x1]
    %977 = vset.pattern.permute.xlu0 0
    %978 = vperm.xlu0 %977, %v975
    %v979 = vpop.permute.xlu0 %978
    %v981 = vperm.slane %v979, 0
    %v982 = vadd.f32 %v974, %v981
    %v983 = vxor.u32 %v982, 2147483648
    %v984 = vmul.f32 %v983, 1.442695
    %v985 = vpow.pop %v984
    %v986 = vadd.f32 %v985, 1.0
    %v987 = vrcp.pop %v986
    %v988 = vmul.f32 %v986, %v987
    %v989 = vsub.f32 1.0, %v988
    %v990 = vmul.f32 %v987, %v989
    %v991 = vadd.f32 %v987, %v990
    %vm992 = vweird.f32 %v986
    %vm993 = vweird.f32 %v987
    %vm994 = vmor %vm992, %vm993
    %v995 = vsel %vm994, %v987, %v991
    %v996 = vand.u32 2147483647, %v986
    %vm997 = vcmp.eq.f32.partialorder %v996, 8.507059e+37
    %v998 = vand.u32 %v986, 2147483648
    %v999 = vor.u32 1.1754944e-38, %v998
    %v1000 = vsel %vm997, %v999, %v995
    %v1001 = vmul.f32 1.0, %v1000
    %1002 = vst [vmem:[#allocation3] sm:$0x1] %v1001
    // Predicated region
    $region30: #{tpu_custom_call.1} parent=1 // pred_check
      _
    $region31: #{tpu_custom_call.1} parent=1 // pred_check_branch
      %1004 = sbr.rel (0) target = $region33
    $region32: #{tpu_custom_call.1} parent=1 // pred_region
      %1006 = vsyncadd [#allocation4], 0
      %s1008 = sshll.u32 [#allocation3], 4
      %s1009 = int_to_ptr.vmem [resolvable:$true] %s1008
      %s1010 = sshll.u32 %s7, 4
      %s1011 = int_to_ptr.hbm [resolvable:$true] %s1010
      %1013 = dma.vmem_to_hbm [thread:$0]  %s1009, 16, %s1011, [#allocation4]
    $region33: #{tpu_custom_call.1} parent=1 // pred_fallthru
      _
    // Predicated region
    $region34: #{tpu_custom_call.1} parent=1 // pred_check
      _
    $region35: #{tpu_custom_call.1} parent=1 // pred_check_branch
      %1015 = sbr.rel (0) target = $region37
    $region36: #{tpu_custom_call.1} parent=1 // pred_region
      %1017 = dma.done [#allocation4], 16
    $region37: #{tpu_custom_call.1} parent=1 // pred_fallthru
      _
    %1018 = vsyncpa [#allocation4], 1

</llo_original>
